<compile_context>
chip_gen: v6e
topology: v6e:2x2x1
jax: 0.10.0
libtpu: 0.0.40
codegen_flags: <defaults>
</compile_context>

<pallas_src>
import functools

import jax
import jax.numpy as jnp
from jax import lax
from jax.experimental import pallas as pl
from jax.experimental.pallas import tpu as pltpu

_LOG2E = 1.4426950408889634


def _rbf_body_2d(c_ref, x1_ref, x2_ref, x1n_ref, x2n_ref, o_ref, *, bf16_mxu):
    # x1_ref: (tm, D), x2_ref: (tn, D), x1n_ref: (tm, 1), x2n_ref: (1, tn)
    a = x1_ref[...]
    b = x2_ref[...]
    if bf16_mxu:
        a = a.astype(jnp.bfloat16)
        b = b.astype(jnp.bfloat16)
    # Cross term on the MXU; contract both operands on their last dim so no
    # explicit transpose/relayout of the (tn, D) tile is needed.
    ab = lax.dot_general(
        a, b,
        dimension_numbers=(((1,), (1,)), ((), ())),
        preferred_element_type=jnp.float32)                     # (tm, tn)
    # z = scale * ||x1-x2||^2  (scale < 0 is already folded into the norms and
    # into c = -2*scale), so the clamp is a minimum against 0.
    z = c_ref[0] * ab + x1n_ref[...] + x2n_ref[...]
    o_ref[...] = jnp.exp2(jnp.minimum(z, 0.0)).astype(o_ref.dtype)


def _rbf_body_3d(c_ref, x1_ref, x2_ref, x1n_ref, x2n_ref, o_ref, acc_ref, *,
                 bf16_mxu):
    # Same as the 2-D body but with the feature dim tiled on grid axis 2 and
    # accumulated in an f32 VMEM scratch.
    k = pl.program_id(2)

    @pl.when(k == 0)
    def _():
        acc_ref[...] = jnp.zeros_like(acc_ref)

    a = x1_ref[...]
    b = x2_ref[...]
    if bf16_mxu:
        a = a.astype(jnp.bfloat16)
        b = b.astype(jnp.bfloat16)
    acc_ref[...] += lax.dot_general(
        a, b,
        dimension_numbers=(((1,), (1,)), ((), ())),
        preferred_element_type=jnp.float32)

    @pl.when(k == pl.num_programs(2) - 1)
    def _():
        z = c_ref[0] * acc_ref[...] + x1n_ref[...] + x2n_ref[...]
        o_ref[...] = jnp.exp2(jnp.minimum(z, 0.0)).astype(o_ref.dtype)


def _round_up(x, m):
    return (x + m - 1) // m * m


def rbf_kernel_matrix(x1, x2=None, lengthscale=1.0, *, out_dtype=None,
                      bf16_mxu=False, max_workingset_bytes=None):
    """Pairwise RBF kernel K(x1, x2) computed with a Pallas TPU kernel."""
    if x2 is None:
        x2 = x1
    x1 = jnp.asarray(x1, jnp.float32)
    x2 = jnp.asarray(x2, jnp.float32)
    n, d = x1.shape
    m, d2 = x2.shape
    if d != d2:
        raise ValueError("feature dims must match")
    out_dtype = jnp.float32 if out_dtype is None else out_dtype

    # ---- per-generation VMEM handling -----------------------------------
    try:
        vmem_cap = int(pltpu.get_tpu_info().vmem_capacity_bytes)
    except Exception:
        vmem_cap = 64 * 1024 * 1024      # conservative (v7x per-TC) fallback
    # Generous on 128 MiB parts (v5e/v6e), conservative on v7x (64 MiB/TC).
    vmem_limit = min(vmem_cap * 3 // 4, 96 * 1024 * 1024)
    # Double-buffered working-set budget, leaving headroom for Pallas scratch.
    budget = vmem_limit // 2
    if max_workingset_bytes is not None:
        budget = int(max_workingset_bytes)

    # ---- scale folding ----------------------------------------------------
    ls = float(lengthscale)
    # TODO(synk): lengthscale == 0 is mathematically ill-defined; the tiny
    # clamp below only prevents NaNs from inf*0 on the diagonal.
    ls2 = max(ls * ls, 1e-30)
    scale = -_LOG2E / (2.0 * ls2)                                # < 0
    c = jnp.full((1,), -2.0 * scale, jnp.float32)                # SMEM scalar

    # Pre-scaled squared norms; layouts chosen so the kernel needs no
    # transpose: (n, 1) broadcasts as a column, (1, m) as a row.
    x1n = jnp.sum(x1 * x1, axis=-1, keepdims=True) * scale        # (n, 1)
    x2n = (jnp.sum(x2 * x2, axis=-1, keepdims=True) * scale).T    # (1, m)

    # ---- tile selection ---------------------------------------------------
    # Wide lane-dense output tiles when D is small (store-bound); squarer
    # tiles when D is large (cuts x2 re-fetch traffic ~2x for same VMEM).
    if d <= 256:
        tm_cap, tn_cap = 256, 1024
    else:
        tm_cap, tn_cap = 512, 512
    tm = min(tm_cap, _round_up(n, 8))
    tn = min(tn_cap, _round_up(m, 128))

    def ws_bytes(tm_, tn_, tk_, with_acc):
        dbuf = 2 * 4 * (tm_ * tn_ + tm_ * tk_ + tn_ * tk_ + tm_ + tn_)
        return dbuf + (4 * tm_ * tn_ if with_acc else 0)

    # First try the whole feature dim in one step; shrink tm before tn
    # (keeps output stores lane-dense), and never let tn drop below 512
    # (or the padded problem width).
    tk = d
    tm_floor = min(128, _round_up(n, 8))
    tn_floor = min(512, _round_up(m, 128))
    while ws_bytes(tm, tn, tk, False) > budget and tm > tm_floor:
        tm = max(tm_floor, _round_up(tm // 2, 8))
    while ws_bytes(tm, tn, tk, False) > budget and tn > tn_floor:
        tn = max(tn_floor, _round_up(tn // 2, 128))

    if ws_bytes(tm, tn, tk, False) <= budget:
        nk = 1
    else:
        # Tile the feature dim with an f32 accumulator instead of shrinking
        # the output tile further.
        tk = 512
        while ws_bytes(tm, tn, tk, True) > budget and tk > 128:
            tk //= 2
        d_pad = _round_up(d, tk)
        nk = d_pad // tk
        if d_pad != d:
            # Zero-pad only the (small) inputs along D; zeros contribute
            # nothing to the dot product or the norms.
            x1 = jnp.pad(x1, ((0, 0), (0, d_pad - d)))
            x2 = jnp.pad(x2, ((0, 0), (0, d_pad - d)))

    grid_i = pl.cdiv(n, tm)
    grid_j = pl.cdiv(m, tn)

    # Output is exactly (n, m): edge blocks are masked by Pallas, so there is
    # no padded intermediate and no post-kernel slice copy.
    out_shape = jax.ShapeDtypeStruct((n, m), out_dtype)

    if nk == 1:
        out = pl.pallas_call(
            functools.partial(_rbf_body_2d, bf16_mxu=bf16_mxu),
            out_shape=out_shape,
            grid_spec=pltpu.PrefetchScalarGridSpec(
                num_scalar_prefetch=0,
                grid=(grid_i, grid_j),
                in_specs=[
                    pl.BlockSpec(memory_space=pltpu.MemorySpace.SMEM),  # c
                    pl.BlockSpec((tm, tk), lambda i, j: (i, 0)),        # x1
                    pl.BlockSpec((tn, tk), lambda i, j: (j, 0)),        # x2
                    pl.BlockSpec((tm, 1), lambda i, j: (i, 0)),         # x1n
                    pl.BlockSpec((1, tn), lambda i, j: (0, j)),         # x2n
                ],
                out_specs=pl.BlockSpec((tm, tn), lambda i, j: (i, j)),
            ),
            compiler_params=pltpu.CompilerParams(
                dimension_semantics=("parallel", "parallel"),
                vmem_limit_bytes=int(vmem_limit)),
        )(c, x1, x2, x1n, x2n)
    else:
        out = pl.pallas_call(
            functools.partial(_rbf_body_3d, bf16_mxu=bf16_mxu),
            out_shape=out_shape,
            grid_spec=pltpu.PrefetchScalarGridSpec(
                num_scalar_prefetch=0,
                grid=(grid_i, grid_j, nk),
                in_specs=[
                    pl.BlockSpec(memory_space=pltpu.MemorySpace.SMEM),     # c
                    pl.BlockSpec((tm, tk), lambda i, j, k: (i, k)),        # x1
                    pl.BlockSpec((tn, tk), lambda i, j, k: (j, k)),        # x2
                    pl.BlockSpec((tm, 1), lambda i, j, k: (i, 0)),         # x1n
                    pl.BlockSpec((1, tn), lambda i, j, k: (0, j)),         # x2n
                ],
                out_specs=pl.BlockSpec((tm, tn), lambda i, j, k: (i, j)),
                scratch_shapes=[pltpu.VMEM((tm, tn), jnp.float32)],
            ),
            compiler_params=pltpu.CompilerParams(
                dimension_semantics=("parallel", "parallel", "arbitrary"),
                vmem_limit_bytes=int(vmem_limit)),
        )(c, x1, x2, x1n, x2n)

    return out


class MyKernelPallas:
    """JAX/Pallas analogue of the PyTorch `myKernel` module."""

    def __init__(self, lengthscale=None):
        self.training = False
        self.lengthscale = 1.0 if lengthscale is None else float(lengthscale)

    def forward(self, x1, x2=None):
        # TODO(synk): the PyTorch base class raises NotImplementedError here;
        # we implement the canonical RBF kernel implied by `lengthscale`.
        return rbf_kernel_matrix(x1, x2, self.lengthscale)

    def __call__(self, x1, x2=None):
        return self.forward(x1, x2)


def _ref_rbf(x1, x2, ls):
    sq = (jnp.sum(x1 * x1, -1)[:, None] + jnp.sum(x2 * x2, -1)[None, :]
          - 2.0 * x1 @ x2.T)
    return jnp.exp(-jnp.maximum(sq, 0.0) / (2.0 * ls ** 2))


if __name__ == "__main__":
    key = jax.random.PRNGKey(0)
    k1, k2, k3, k4 = jax.random.split(key, 4)

    # Tile-friendly shapes.
    N, M, D = 64, 128, 32
    x1 = jax.random.normal(k1, (N, D), dtype=jnp.float32)
    x2 = jax.random.normal(k2, (M, D), dtype=jnp.float32)

    kern = MyKernelPallas(lengthscale=1.5)

    out = kern(x1, x2)          # cross kernel  (N, M)
    out_self = kern(x1)         # x2=None path  (N, N) -- ragged output cols

    # Non-tile-aligned (ragged) shapes to exercise edge-block masking.
    Nr, Mr, Dr = 50, 72, 16
    y1 = jax.random.normal(k3, (Nr, Dr), dtype=jnp.float32)
    y2 = jax.random.normal(k4, (Mr, Dr), dtype=jnp.float32)
    out_ragged = kern(y1, y2)   # (Nr, Mr)

    # Force the D-tiled accumulator path (3-D grid + pl.when init/finalize)
    # on a small problem by shrinking the working-set budget.
    z1 = jax.random.normal(k1, (40, 200), dtype=jnp.float32)
    z2 = jax.random.normal(k2, (96, 200), dtype=jnp.float32)
    out_dtile = rbf_kernel_matrix(z1, z2, 0.9,
                                  max_workingset_bytes=300 * 1024)

    jax.block_until_ready((out, out_self, out_ragged, out_dtile))

    # Correctness checks against a pure-JAX reference.
    assert out.shape == (N, M)
    assert out_self.shape == (N, N)
    assert out_ragged.shape == (Nr, Mr)
    assert out_dtile.shape == (40, 96)
    assert jnp.max(jnp.abs(out - _ref_rbf(x1, x2, 1.5))) < 1e-4
    assert jnp.max(jnp.abs(out_self - _ref_rbf(x1, x1, 1.5))) < 1e-4
    assert jnp.max(jnp.abs(out_ragged - _ref_rbf(y1, y2, 1.5))) < 1e-4
    assert jnp.max(jnp.abs(out_dtile - _ref_rbf(z1, z2, 0.9))) < 1e-4

    print("KERNEL_OK")
</pallas_src>

<mosaic_0001>
module attributes {stable_mosaic.version = 11 : i64} {
  func.func @_rbf_body_2d(%arg0: i32, %arg1: i32, %arg2: memref<1xf32, #tpu.memory_space<smem>>, %arg3: memref<64x32xf32, #tpu.memory_space<vmem>>, %arg4: memref<128x32xf32, #tpu.memory_space<vmem>>, %arg5: memref<64x1xf32, #tpu.memory_space<vmem>>, %arg6: memref<1x128xf32, #tpu.memory_space<vmem>>, %arg7: memref<64x128xf32, #tpu.memory_space<vmem>>) attributes {dimension_semantics = [#tpu.dimension_semantics<parallel>, #tpu.dimension_semantics<parallel>], iteration_bounds = array<i64: 1, 1>, scalar_prefetch = 0 : i64, scratch_operands = 0 : i64, tpu.core_type = #tpu.core_type<tc>, window_params = [{transform_indices = @transform_0, window_bounds = array<i64: 1>}, {transform_indices = @transform_1, window_bounds = array<i64: 64, 32>}, {transform_indices = @transform_2, window_bounds = array<i64: 128, 32>}, {transform_indices = @transform_3, window_bounds = array<i64: 64, 1>}, {transform_indices = @transform_4, window_bounds = array<i64: 1, 128>}, {transform_indices = @transform_5, window_bounds = array<i64: 64, 128>}]} {
    %c0 = arith.constant 0 : index
    %c0_0 = arith.constant 0 : index
    %0 = vector.load %arg3[%c0, %c0_0] : memref<64x32xf32, #tpu.memory_space<vmem>>, vector<64x32xf32>
    %c0_1 = arith.constant 0 : index
    %c0_2 = arith.constant 0 : index
    %1 = vector.load %arg4[%c0_1, %c0_2] : memref<128x32xf32, #tpu.memory_space<vmem>>, vector<128x32xf32>
    %cst = arith.constant dense<0.000000e+00> : vector<64x128xf32>
    %2 = tpu.matmul %0, %1, %cst {dimension_numbers = #tpu.dot_dimension_numbers<[1], [1], [0], [0], [0, 0, 1, 0], [], []>} : vector<64x32xf32>, vector<128x32xf32>, vector<64x128xf32> -> vector<64x128xf32>
    %c0_3 = arith.constant 0 : index
    %3 = memref.load %arg2[%c0_3] : memref<1xf32, #tpu.memory_space<smem>>
    %4 = vector.broadcast %3 : f32 to vector<64x128xf32>
    %5 = arith.mulf %4, %2 : vector<64x128xf32>
    %c0_4 = arith.constant 0 : index
    %c0_5 = arith.constant 0 : index
    %6 = vector.load %arg5[%c0_4, %c0_5] : memref<64x1xf32, #tpu.memory_space<vmem>>, vector<64x1xf32>
    %7 = vector.broadcast %6 : vector<64x1xf32> to vector<64x128xf32>
    %8 = arith.addf %5, %7 : vector<64x128xf32>
    %c0_6 = arith.constant 0 : index
    %c0_7 = arith.constant 0 : index
    %9 = vector.load %arg6[%c0_6, %c0_7] : memref<1x128xf32, #tpu.memory_space<vmem>>, vector<1x128xf32>
    %10 = vector.broadcast %9 : vector<1x128xf32> to vector<64x128xf32>
    %11 = arith.addf %8, %10 : vector<64x128xf32>
    %cst_8 = arith.constant 0.000000e+00 : f32
    %12 = vector.broadcast %cst_8 : f32 to vector<64x128xf32>
    %13 = arith.minimumf %11, %12 : vector<64x128xf32>
    %14 = math.exp2 %13 : vector<64x128xf32>
    %c0_9 = arith.constant 0 : index
    %c0_10 = arith.constant 0 : index
    %15 = vector.load %arg7[%c0_9, %c0_10] : memref<64x128xf32, #tpu.memory_space<vmem>>, vector<64x128xf32>
    tpu.vector_store %arg7[%c0_9, %c0_10], %14 {strides = array<i32>} : memref<64x128xf32, #tpu.memory_space<vmem>>, vector<64x128xf32>,
    return
  }
  func.func @transform_0(%arg0: i32, %arg1: i32) -> i32 {
    %c0_i32 = arith.constant 0 : i32
    %c0_i32_0 = arith.constant 0 : i32
    return %c0_i32 : i32
  }
  func.func @transform_1(%arg0: i32, %arg1: i32) -> (i32, i32) {
    %c0_i32 = arith.constant 0 : i32
    %c0_i32_0 = arith.constant 0 : i32
    return %arg0, %c0_i32 : i32, i32
  }
  func.func @transform_2(%arg0: i32, %arg1: i32) -> (i32, i32) {
    %c0_i32 = arith.constant 0 : i32
    %c0_i32_0 = arith.constant 0 : i32
    return %arg1, %c0_i32 : i32, i32
  }
  func.func @transform_3(%arg0: i32, %arg1: i32) -> (i32, i32) {
    %c0_i32 = arith.constant 0 : i32
    %c0_i32_0 = arith.constant 0 : i32
    return %arg0, %c0_i32 : i32, i32
  }
  func.func @transform_4(%arg0: i32, %arg1: i32) -> (i32, i32) {
    %c0_i32 = arith.constant 0 : i32
    %c0_i32_0 = arith.constant 0 : i32
    return %c0_i32, %arg1 : i32, i32
  }
  func.func @transform_5(%arg0: i32, %arg1: i32) -> (i32, i32) {
    %c0_i32 = arith.constant 0 : i32
    return %arg0, %arg1 : i32, i32
  }
}

</mosaic_0001>

<llo_original>
// kernel: tpu_custom_call.1
$region0: #{tpu_custom_call.1}
  #allocation0 [shape = 'u32[]', space=smem, size = 0x4, offset = 0x4, fixed_abs, tag = 'smem constant byte address 0x4 - core index']
  #allocation1 [shape = 'u32[144,128]{1,0:T(1,128)}', space=vmem, size = 0x12000, scoped, tag = 'internal scratch']
  #allocation2 [shape = 'f32[1]{0:T(128)S(6)}', space=smem, size = 0x200, scoped, tag = 'scoped memory for tpu_custom_call.1']
  %s0 = inlined_call_operand.<no memory space> [shape: f32[1], index: 0, kind: input, shape index: {}]
  %s1 = inlined_call_operand.vmem [shape: f32[64,32], index: 1, kind: input, shape index: {}]
  %s2 = inlined_call_operand.vmem [shape: f32[128,32], index: 2, kind: input, shape index: {}]
  %s3 = inlined_call_operand.vmem [shape: f32[64,1], index: 3, kind: input, shape index: {}]
  %s4 = inlined_call_operand.vmem [shape: f32[1,128], index: 4, kind: input, shape index: {}]
  %s5 = inlined_call_operand.hbm [shape: f32[64,128], index: 5, kind: output, shape index: {}]
  %s6 = sld [smem:[#allocation0]]
  $region30: #{tpu_custom_call.1} parent=0
    _
  %s8 = ssub.s32 1, %s6
  %s9 = scalar_select 0, %s8, %s6
  %10 = sst [smem:[#allocation2]] %s0
  $region1: #{tpu_custom_call.1} parent=0
    #allocation3 [shape = 'u8[32768]{0}', space=vmem, size = 0x8000, scoped, tag = 'output window, operand 0, single buffered']
    #allocation4 [shape = 's32[1]{0}', space=sflag, size = 0x4, scoped, tag = 'scoped memory for tpu_custom_call.1']
    %11 = vsyncpa [#allocation4], 0
    // Predicated region
    $region2: #{tpu_custom_call.1} parent=1 // pred_check
      _
    $region3: #{tpu_custom_call.1} parent=1 // pred_check_branch
      %13 = sbr.rel (0) target = $region5
    $region4: #{tpu_custom_call.1} parent=1 // pred_region
      _
    $region5: #{tpu_custom_call.1} parent=1 // pred_fallthru
      _
    // Predicated region
    $region6: #{tpu_custom_call.1} parent=1 // pred_check
      _
    $region7: #{tpu_custom_call.1} parent=1 // pred_check_branch
      %15 = sbr.rel (0) target = $region9
    $region8: #{tpu_custom_call.1} parent=1 // pred_region
      _
    $region9: #{tpu_custom_call.1} parent=1 // pred_fallthru
      _
    // Predicated region
    $region10: #{tpu_custom_call.1} parent=1 // pred_check
      _
    $region11: #{tpu_custom_call.1} parent=1 // pred_check_branch
      %17 = sbr.rel (0) target = $region13
    $region12: #{tpu_custom_call.1} parent=1 // pred_region
      _
    $region13: #{tpu_custom_call.1} parent=1 // pred_fallthru
      _
    // Predicated region
    $region14: #{tpu_custom_call.1} parent=1 // pred_check
      _
    $region15: #{tpu_custom_call.1} parent=1 // pred_check_branch
      %19 = sbr.rel (0) target = $region17
    $region16: #{tpu_custom_call.1} parent=1 // pred_region
      _
    $region17: #{tpu_custom_call.1} parent=1 // pred_fallthru
      _
    // Predicated region
    $region18: #{tpu_custom_call.1} parent=1 // pred_check
      _
    $region19: #{tpu_custom_call.1} parent=1 // pred_check_branch
      %21 = sbr.rel (0) target = $region21
    $region20: #{tpu_custom_call.1} parent=1 // pred_region
      _
    $region21: #{tpu_custom_call.1} parent=1 // pred_fallthru
      _
    %v22 = vld [vmem:[%s1] sm:$0xff]
    %v23 = vld [vmem:[%s1 + $0x8] sm:$0xff]
    %v24 = vld [vmem:[%s1 + $0x10] sm:$0xff]
    %v25 = vld [vmem:[%s1 + $0x18] sm:$0xff]
    %v26 = vld [vmem:[%s1 + $0x20] sm:$0xff]
    %v27 = vld [vmem:[%s1 + $0x28] sm:$0xff]
    %v28 = vld [vmem:[%s1 + $0x30] sm:$0xff]
    %v29 = vld [vmem:[%s1 + $0x38] sm:$0xff]
    %v30 = vld [vmem:[%s2] sm:$0xff]
    %v31 = vld [vmem:[%s2 + $0x8] sm:$0xff]
    %v32 = vld [vmem:[%s2 + $0x10] sm:$0xff]
    %v33 = vld [vmem:[%s2 + $0x18] sm:$0xff]
    %v34 = vld [vmem:[%s2 + $0x20] sm:$0xff]
    %v35 = vld [vmem:[%s2 + $0x28] sm:$0xff]
    %v36 = vld [vmem:[%s2 + $0x30] sm:$0xff]
    %v37 = vld [vmem:[%s2 + $0x38] sm:$0xff]
    %v38 = vld [vmem:[%s2 + $0x40] sm:$0xff]
    %v39 = vld [vmem:[%s2 + $0x48] sm:$0xff]
    %v40 = vld [vmem:[%s2 + $0x50] sm:$0xff]
    %v41 = vld [vmem:[%s2 + $0x58] sm:$0xff]
    %v42 = vld [vmem:[%s2 + $0x60] sm:$0xff]
    %v43 = vld [vmem:[%s2 + $0x68] sm:$0xff]
    %v44 = vld [vmem:[%s2 + $0x70] sm:$0xff]
    %v45 = vld [vmem:[%s2 + $0x78] sm:$0xff]
    %vm46 = vcmask 261120
    %v48 = vsel %vm46, %v22, 0
    %v51 = vsel %vm46, %v23, 0
    %v54 = vsel %vm46, %v24, 0
    %v57 = vsel %vm46, %v25, 0
    %v60 = vsel %vm46, %v26, 0
    %v63 = vsel %vm46, %v27, 0
    %v66 = vsel %vm46, %v28, 0
    %v69 = vsel %vm46, %v29, 0
    %v72 = vsel %vm46, %v30, 0
    %v75 = vsel %vm46, %v31, 0
    %v78 = vsel %vm46, %v32, 0
    %v81 = vsel %vm46, %v33, 0
    %v84 = vsel %vm46, %v34, 0
    %v87 = vsel %vm46, %v35, 0
    %v90 = vsel %vm46, %v36, 0
    %v93 = vsel %vm46, %v37, 0
    %v96 = vsel %vm46, %v38, 0
    %v99 = vsel %vm46, %v39, 0
    %v102 = vsel %vm46, %v40, 0
    %v105 = vsel %vm46, %v41, 0
    %v108 = vsel %vm46, %v42, 0
    %v111 = vsel %vm46, %v43, 0
    %v114 = vsel %vm46, %v44, 0
    %v117 = vsel %vm46, %v45, 0
    %119 = vmatprep.subr.mxu0 0.0
    %120 = vmatpush1.xpose.msra.mxu0 %v117
    %121 = vmatprep.subr.mxu0 0.0
    %122 = vmatpush1.xpose.msra.mxu0 %v114
    %123 = vmatprep.subr.mxu0 0.0
    %124 = vmatpush1.xpose.msra.mxu0 %v111
    %125 = vmatprep.subr.mxu0 0.0
    %126 = vmatpush1.xpose.msra.mxu0 %v108
    %127 = vmatprep.subr.mxu0 0.0
    %128 = vmatpush1.xpose.msra.mxu0 %v105
    %129 = vmatprep.subr.mxu0 0.0
    %130 = vmatpush1.xpose.msra.mxu0 %v102
    %131 = vmatprep.subr.mxu0 0.0
    %132 = vmatpush1.xpose.msra.mxu0 %v99
    %133 = vmatprep.subr.mxu0 0.0
    %134 = vmatpush1.xpose.msra.mxu0 %v96
    %135 = vmatprep.subr.mxu0 0.0
    %136 = vmatpush1.xpose.msra.mxu0 %v93
    %137 = vmatprep.subr.mxu0 0.0
    %138 = vmatpush1.xpose.msra.mxu0 %v90
    %139 = vmatprep.subr.mxu0 0.0
    %140 = vmatpush1.xpose.msra.mxu0 %v87
    %141 = vmatprep.subr.mxu0 0.0
    %142 = vmatpush1.xpose.msra.mxu0 %v84
    %143 = vmatprep.subr.mxu0 0.0
    %144 = vmatpush1.xpose.msra.mxu0 %v81
    %145 = vmatprep.subr.mxu0 0.0
    %146 = vmatpush1.xpose.msra.mxu0 %v78
    %147 = vmatprep.subr.mxu0 0.0
    %148 = vmatpush1.xpose.msra.mxu0 %v75
    %149 = vmatprep.subr.mxu0 0.0
    %150 = vmatpush1.xpose.msra.mxu0 %v72
    %151 = vmatprep.subr.mxu0 0.0
    %152 = vmatpush2.xpose.msra.mxu0 0.0
    %153 = vmatprep.subr.mxu0 0.0
    %154 = vmatpush2.xpose.msra.mxu0 0.0
    %155 = vmatprep.subr.mxu0 0.0
    %156 = vmatpush2.xpose.msra.mxu0 0.0
    %157 = vmatprep.subr.mxu0 0.0
    %158 = vmatpush2.xpose.msra.mxu0 0.0
    %159 = vmatprep.subr.mxu0 0.0
    %160 = vmatpush2.xpose.msra.mxu0 0.0
    %161 = vmatprep.subr.mxu0 0.0
    %162 = vmatpush2.xpose.msra.mxu0 0.0
    %163 = vmatprep.subr.mxu0 0.0
    %164 = vmatpush2.xpose.msra.mxu0 0.0
    %165 = vmatprep.subr.mxu0 0.0
    %166 = vmatpush2.xpose.msra.mxu0 0.0
    %167 = vmatprep.subr.mxu0 0.0
    %168 = vmatpush2.xpose.msra.mxu0 0.0
    %169 = vmatprep.subr.mxu0 0.0
    %170 = vmatpush2.xpose.msra.mxu0 0.0
    %171 = vmatprep.subr.mxu0 0.0
    %172 = vmatpush2.xpose.msra.mxu0 0.0
    %173 = vmatprep.subr.mxu0 0.0
    %174 = vmatpush2.xpose.msra.mxu0 0.0
    %175 = vmatprep.subr.mxu0 0.0
    %176 = vmatpush2.xpose.msra.mxu0 0.0
    %177 = vmatprep.subr.mxu0 0.0
    %178 = vmatpush2.xpose.msra.mxu0 0.0
    %179 = vmatprep.subr.mxu0 0.0
    %180 = vmatpush2.xpose.msra.mxu0 0.0
    %181 = vmatprep.subr.mxu0 0.0
    %182 = vmatpush2.xpose.msra.mxu0 0.0
    %183 = vmatprep.mubr.f32.mxu0 0.0
    %184 = vmatmul.mubr.f32.gmra.mxu0 %v48
    %v185 = vpop.f32.mrf.mxu0
    %v186 = vadd.f32 0.0, %v185
    %v187 = vpop.f32.mrf.mxu0
    %188 = vmatprep.mubr.f32.mxu0 0.0
    %189 = vmatmul.mubr.f32.gmra.mxu0 %v51
    %v190 = vpop.f32.mrf.mxu0
    %v191 = vadd.f32 0.0, %v190
    %v192 = vpop.f32.mrf.mxu0
    %193 = vmatprep.mubr.f32.mxu0 0.0
    %194 = vmatmul.mubr.f32.gmra.mxu0 %v54
    %v195 = vpop.f32.mrf.mxu0
    %v196 = vadd.f32 0.0, %v195
    %v197 = vpop.f32.mrf.mxu0
    %198 = vmatprep.mubr.f32.mxu0 0.0
    %199 = vmatmul.mubr.f32.gmra.mxu0 %v57
    %v200 = vpop.f32.mrf.mxu0
    %v201 = vadd.f32 0.0, %v200
    %v202 = vpop.f32.mrf.mxu0
    %203 = vmatprep.mubr.f32.mxu0 0.0
    %204 = vmatmul.mubr.f32.gmra.mxu0 %v60
    %v205 = vpop.f32.mrf.mxu0
    %v206 = vadd.f32 0.0, %v205
    %v207 = vpop.f32.mrf.mxu0
    %208 = vmatprep.mubr.f32.mxu0 0.0
    %209 = vmatmul.mubr.f32.gmra.mxu0 %v63
    %v210 = vpop.f32.mrf.mxu0
    %v211 = vadd.f32 0.0, %v210
    %v212 = vpop.f32.mrf.mxu0
    %213 = vmatprep.mubr.f32.mxu0 0.0
    %214 = vmatmul.mubr.f32.gmra.mxu0 %v66
    %v215 = vpop.f32.mrf.mxu0
    %v216 = vadd.f32 0.0, %v215
    %v217 = vpop.f32.mrf.mxu0
    %218 = vmatprep.mubr.f32.mxu0 0.0
    %219 = vmatmul.mubr.f32.gmra.mxu0 %v69
    %v220 = vpop.f32.mrf.mxu0
    %v221 = vadd.f32 0.0, %v220
    %v222 = vpop.f32.mrf.mxu0
    %223 = vdwg.mxu0
    %s224 = sld [smem:[#allocation2]]
    %v225 = vstv %s224
    %v226 = vmul.f32 %v225, %v186
    %v227 = vmul.f32 %v225, %v191
    %v228 = vmul.f32 %v225, %v196
    %v229 = vmul.f32 %v225, %v201
    %v230 = vmul.f32 %v225, %v206
    %v231 = vmul.f32 %v225, %v211
    %v232 = vmul.f32 %v225, %v216
    %v233 = vmul.f32 %v225, %v221
    %v234 = vld [vmem:[%s3] sm:$0xff]
    %v235 = vld [vmem:[%s3 + $0x8] sm:$0xff]
    %v236 = vld [vmem:[%s3 + $0x10] sm:$0xff]
    %v237 = vld [vmem:[%s3 + $0x18] sm:$0xff]
    %v238 = vld [vmem:[%s3 + $0x20] sm:$0xff]
    %v239 = vld [vmem:[%s3 + $0x28] sm:$0xff]
    %v240 = vld [vmem:[%s3 + $0x30] sm:$0xff]
    %v241 = vld [vmem:[%s3 + $0x38] sm:$0xff]
    %243 = vset.pattern.permute.xlu0 0
    %244 = vperm.xlu0 %243, %v234
    %v245 = vpop.permute.xlu0 %244
    %248 = vset.pattern.permute.xlu0 0
    %249 = vperm.xlu0 %248, %v235
    %v250 = vpop.permute.xlu0 %249
    %253 = vset.pattern.permute.xlu0 0
    %254 = vperm.xlu0 %253, %v236
    %v255 = vpop.permute.xlu0 %254
    %258 = vset.pattern.permute.xlu0 0
    %259 = vperm.xlu0 %258, %v237
    %v260 = vpop.permute.xlu0 %259
    %263 = vset.pattern.permute.xlu0 0
    %264 = vperm.xlu0 %263, %v238
    %v265 = vpop.permute.xlu0 %264
    %268 = vset.pattern.permute.xlu0 0
    %269 = vperm.xlu0 %268, %v239
    %v270 = vpop.permute.xlu0 %269
    %273 = vset.pattern.permute.xlu0 0
    %274 = vperm.xlu0 %273, %v240
    %v275 = vpop.permute.xlu0 %274
    %278 = vset.pattern.permute.xlu0 0
    %279 = vperm.xlu0 %278, %v241
    %v280 = vpop.permute.xlu0 %279
    %v282 = vadd.f32 %v226, %v245
    %v283 = vadd.f32 %v227, %v250
    %v284 = vadd.f32 %v228, %v255
    %v285 = vadd.f32 %v229, %v260
    %v286 = vadd.f32 %v230, %v265
    %v287 = vadd.f32 %v231, %v270
    %v288 = vadd.f32 %v232, %v275
    %v289 = vadd.f32 %v233, %v280
    %v290 = vld [vmem:[%s4] sm:$0x1]
    %v292 = vlaneseq
    %v293 = vshrl.u32 %v292, 7
    %v294 = vsub.s32 0, %v293
    %v295 = vrot.slane %v290, %v294
    %v297 = vadd.f32 %v282, %v295
    %v298 = vadd.f32 %v283, %v295
    %v299 = vadd.f32 %v284, %v295
    %v300 = vadd.f32 %v285, %v295
    %v301 = vadd.f32 %v286, %v295
    %v302 = vadd.f32 %v287, %v295
    %v303 = vadd.f32 %v288, %v295
    %v304 = vadd.f32 %v289, %v295
    %v305 = vmin.f32 %v297, 0.0
    %v306 = vmin.f32 %v298, 0.0
    %v307 = vmin.f32 %v299, 0.0
    %v308 = vmin.f32 %v300, 0.0
    %v309 = vmin.f32 %v301, 0.0
    %v310 = vmin.f32 %v302, 0.0
    %v311 = vmin.f32 %v303, 0.0
    %v312 = vmin.f32 %v304, 0.0
    %v313 = vpow.pop %v305
    %v314 = vpow.pop %v306
    %v315 = vpow.pop %v307
    %v316 = vpow.pop %v308
    %v317 = vpow.pop %v309
    %v318 = vpow.pop %v310
    %v319 = vpow.pop %v311
    %v320 = vpow.pop %v312
    %321 = vst [vmem:[#allocation3] sm:$0xff] %v313
    %322 = vst [vmem:[#allocation3 + $0x8] sm:$0xff] %v314
    %323 = vst [vmem:[#allocation3 + $0x10] sm:$0xff] %v315
    %324 = vst [vmem:[#allocation3 + $0x18] sm:$0xff] %v316
    %325 = vst [vmem:[#allocation3 + $0x20] sm:$0xff] %v317
    %326 = vst [vmem:[#allocation3 + $0x28] sm:$0xff] %v318
    %327 = vst [vmem:[#allocation3 + $0x30] sm:$0xff] %v319
    %328 = vst [vmem:[#allocation3 + $0x38] sm:$0xff] %v320
    // Predicated region
    $region22: #{tpu_custom_call.1} parent=1 // pred_check
      _
    $region23: #{tpu_custom_call.1} parent=1 // pred_check_branch
      %330 = sbr.rel (0) target = $region25
    $region24: #{tpu_custom_call.1} parent=1 // pred_region
      %s332 = ssub.s32 1024, 1024
      %333 = vsyncadd [#allocation4], %s332
      %s334 = sshll.u32 [#allocation3], 4
      %s335 = int_to_ptr.vmem [resolvable:$true] %s334
      %340 = dma.vmem_to_hbm [thread:$0]  %s335, 1024, %s5, [#allocation4], 128, 128, 8
    $region25: #{tpu_custom_call.1} parent=1 // pred_fallthru
      _
    // Predicated region
    $region26: #{tpu_custom_call.1} parent=1 // pred_check
      _
    $region27: #{tpu_custom_call.1} parent=1 // pred_check_branch
      %342 = sbr.rel (0) target = $region29
    $region28: #{tpu_custom_call.1} parent=1 // pred_region
      %343 = dma.done [#allocation4], 1024
    $region29: #{tpu_custom_call.1} parent=1 // pred_fallthru
      _
    %344 = vsyncpa [#allocation4], 1

</llo_original>
